<compile_context>
chip_gen: v7x
topology: tpu7x:2x2x1
jax: 0.10.0
libtpu: 0.0.40
codegen_flags: <defaults>
</compile_context>

<pallas_src>
import math

import jax
import jax.numpy as jnp
from jax.experimental import pallas as pl
from jax.experimental.pallas import tpu as pltpu

_MASK_VALUE = -1e30   # large finite negative: avoids NaN on fully-masked / padded rows
_SUBLANE = 8


def _round_up(x, m):
    return (x + m - 1) // m * m


def _tanh_attention_kernel(hidden_ref, mask_ref, w1_ref, b1_ref, w2_ref, out_ref):
    tb, s, d2 = hidden_ref.shape

    # ---- attn1 = tanh(hidden @ W1 + b1) ------------------------------------
    # In-kernel bf16 cast (no wrapper-side HBM pad/cast pass).  The merge of
    # (TB, S) is layout-preserving because S is a multiple of the sublane tile.
    x = hidden_ref[...].astype(jnp.bfloat16).reshape(tb * s, d2)      # (TB*S, D2) bf16
    a1 = jnp.tanh(
        jnp.dot(x, w1_ref[...], preferred_element_type=jnp.float32)   # MXU, f32 accum
        + b1_ref[...]                                                 # (1, H) broadcast
    ).astype(jnp.bfloat16)        # bf16: halves the largest VMEM intermediate

    # ---- attn2 = a1 @ W2 with N = 1: VPU multiply + lane reduce (f32 accum) -
    scores = jnp.sum(a1 * w2_ref[...], axis=-1, keepdims=True)        # (TB*S, 1) f32
    # Small sublane->lane relayout of TB*S scalars; negligible cost.
    scores = scores.reshape(tb, s)                                    # (TB, S)

    # ---- masked softmax over the sequence axis ------------------------------
    masked = jnp.where(mask_ref[...] != 0, _MASK_VALUE, scores)
    m = jnp.max(masked, axis=-1, keepdims=True)
    e = jnp.exp(masked - m)
    denom = jnp.sum(e, axis=-1, keepdims=True)
    out_ref[...] = e * pl.reciprocal(denom, approx=True)


def tanh_attention(hidden, mask, w1, b1, w2, *, block_target_bytes=8 << 20):
    """TanhAttention forward.

    hidden: (B, S, 2H) float32 or bfloat16; mask: (B, S), nonzero == masked out.
    w1: (2H, H) = attn1.weight.T; b1: (H,) = attn1.bias; w2: (H, 1) = attn2.weight.T
    Returns softmax weights (B, S) float32.
    """
    B, S, D2 = hidden.shape
    H = D2 // 2
    assert w1.shape == (D2, H) and b1.shape == (H,) and w2.shape == (H, 1)

    mask = mask.astype(jnp.int32)

    # Fallback only: keep S a multiple of the sublane tile so the in-kernel
    # (TB, S, D2) -> (TB*S, D2) merge is layout-preserving.  Aligned shapes
    # (the common case) take no extra HBM pass at all.
    S_pad = _round_up(S, _SUBLANE)
    if S_pad != S:
        hidden = jnp.pad(hidden, ((0, 0), (0, S_pad - S), (0, 0)))
        mask = jnp.pad(mask, ((0, 0), (0, S_pad - S)), constant_values=1)

    itemsize = jnp.dtype(hidden.dtype).itemsize

    # ---- batch-tile selection ------------------------------------------------
    # TB is a leading dim of the 3-D hidden block (no (8,128) constraint), but it
    # is the second-to-last dim of the 2-D mask/out blocks, so keep it a multiple
    # of 8 unless it equals B.  Keep >= 2 grid steps when B allows (v7x: 2 TCs).
    per_batch_bytes = S_pad * D2 * itemsize
    tb = max(1, int(block_target_bytes // per_batch_bytes))
    if B >= 2 * _SUBLANE:
        tb = min(tb, B // 2)
        TB = max(_SUBLANE, (tb // _SUBLANE) * _SUBLANE)
    else:
        TB = B                      # tiny batch: single full block (dims == array dims)
    grid = (pl.cdiv(B, TB),)        # partial last block handled by Pallas (writes dropped)

    w1_c = w1.astype(jnp.bfloat16)                 # bf16 MXU operand
    b1_c = b1.reshape(1, H).astype(jnp.float32)
    w2_row = w2.reshape(1, H).astype(jnp.float32)  # column (H,1) -> row (1,H)

    # ---- VMEM budget (includes kernel intermediates) --------------------------
    hid_block = TB * S_pad * D2 * itemsize                       # pipelined input, x2
    x_bytes = 0 if itemsize == 2 else TB * S_pad * D2 * 2        # in-kernel bf16 copy
    a1_bytes = TB * S_pad * H * 2                                # bf16 tanh output
    row_block = TB * S_pad * 4                                   # mask / out / temps
    w_bytes = D2 * H * 2 + 2 * H * 4
    need = 2 * hid_block + x_bytes + a1_bytes + 6 * row_block + 2 * w_bytes
    vmem_limit = int(min(max(2 * need, 16 << 20), 48 << 20))     # <= 48 MiB: safe on v7x

    # ---- cost estimate so XLA schedules neighbors correctly -------------------
    cost = pl.CostEstimate(
        flops=2 * B * S_pad * D2 * H + 2 * B * S_pad * H,
        transcendentals=B * S_pad * (H + 1),
        bytes_accessed=(hidden.size * itemsize + mask.size * 4
                        + D2 * H * 2 + 2 * H * 4 + B * S_pad * 4),
    )

    out = pl.pallas_call(
        _tanh_attention_kernel,
        out_shape=jax.ShapeDtypeStruct((B, S_pad), jnp.float32),
        grid_spec=pltpu.PrefetchScalarGridSpec(
            num_scalar_prefetch=0,
            grid=grid,
            in_specs=[
                pl.BlockSpec((TB, S_pad, D2), lambda i: (i, 0, 0)),  # hidden tile (pipelined)
                pl.BlockSpec((TB, S_pad), lambda i: (i, 0)),         # mask tile
                pl.BlockSpec((D2, H), lambda i: (0, 0)),             # w1 (resident)
                pl.BlockSpec((1, H), lambda i: (0, 0)),              # b1 (resident)
                pl.BlockSpec((1, H), lambda i: (0, 0)),              # w2 (resident)
            ],
            out_specs=pl.BlockSpec((TB, S_pad), lambda i: (i, 0)),
        ),
        compiler_params=pltpu.CompilerParams(
            dimension_semantics=("parallel",),   # independent batch tiles -> both TCs on v7x
            vmem_limit_bytes=vmem_limit,
        ),
        cost_estimate=cost,
    )(hidden, mask, w1_c, b1_c, w2_row)

    return out if S_pad == S else out[:, :S]


# ----------------------------- references -----------------------------------

def _reference_f32(hidden, mask, w1, b1, w2):
    a1 = jnp.tanh(hidden @ w1 + b1)
    scores = (a1 @ w2)[..., 0]
    scores = jnp.where(mask != 0, -jnp.inf, scores)
    return jax.nn.softmax(scores, axis=-1)


def _reference_mirrored(hidden, mask, w1, b1, w2):
    # Mirrors the kernel's bf16 matmul inputs / bf16 a1 with f32 accumulation.
    h = hidden.astype(jnp.bfloat16).astype(jnp.float32)
    w1c = w1.astype(jnp.bfloat16).astype(jnp.float32)
    a1 = jnp.tanh(h @ w1c + b1)
    a1 = a1.astype(jnp.bfloat16).astype(jnp.float32)
    scores = a1 @ w2[:, 0]
    scores = jnp.where(mask != 0, _MASK_VALUE, scores)
    return jax.nn.softmax(scores, axis=-1)


if __name__ == "__main__":
    hidden_dim = 16
    B, S = 2, 8
    D2, H = hidden_dim * 2, hidden_dim

    key = jax.random.PRNGKey(0)
    k_hid, k_mask, k_w1, k_w2 = jax.random.split(key, 4)

    # Deterministic parameter init mirroring the PyTorch module's __init__
    stdv1 = 1.0 / math.sqrt(D2)
    w1 = jax.random.uniform(k_w1, (D2, H), jnp.float32, -stdv1, stdv1)  # attn1.weight.T
    b1 = jnp.zeros((H,), jnp.float32)                                   # attn1.bias (zeros)
    stdv2 = 1.0 / math.sqrt(H)
    w2 = jax.random.uniform(k_w2, (H, 1), jnp.float32, -stdv2, stdv2)   # attn2.weight.T

    hidden = jax.random.normal(k_hid, (B, S, D2), jnp.float32)
    mask = (jax.random.uniform(k_mask, (B, S)) < 0.3).astype(jnp.int32)
    mask = mask.at[:, 0].set(0)  # at least one unmasked position per row

    out = jax.block_until_ready(tanh_attention(hidden, mask, w1, b1, w2))
    assert out.shape == (B, S) and out.dtype == jnp.float32

    ref_mirror = _reference_mirrored(hidden, mask, w1, b1, w2)
    ref_f32 = _reference_f32(hidden, mask, w1, b1, w2)
    assert jnp.allclose(out, ref_mirror, atol=5e-3, rtol=5e-3), "mismatch vs bf16-mirrored reference"
    assert jnp.allclose(out, ref_f32, atol=2e-2), "mismatch vs f32 reference"
    assert jnp.allclose(out.sum(axis=-1), 1.0, atol=5e-3), "softmax rows do not sum to 1"

    print("KERNEL_OK")
</pallas_src>

<mosaic_0001>
module attributes {stable_mosaic.version = 11 : i64} {
  func.func @_tanh_attention_kernel(%arg0: i32, %arg1: memref<2x8x32xf32, #tpu.memory_space<vmem>>, %arg2: memref<2x8xi32, #tpu.memory_space<vmem>>, %arg3: memref<32x16xbf16, #tpu.memory_space<vmem>>, %arg4: memref<1x16xf32, #tpu.memory_space<vmem>>, %arg5: memref<1x16xf32, #tpu.memory_space<vmem>>, %arg6: memref<2x8xf32, #tpu.memory_space<vmem>>) attributes {dimension_semantics = [#tpu.dimension_semantics<parallel>], iteration_bounds = array<i64: 1>, scalar_prefetch = 0 : i64, scratch_operands = 0 : i64, tpu.core_type = #tpu.core_type<tc>, window_params = [{transform_indices = @transform_0, window_bounds = array<i64: 2, 8, 32>}, {transform_indices = @transform_1, window_bounds = array<i64: 2, 8>}, {pipeline_mode = #tpu.pipeline_mode<synchronous>, transform_indices = @transform_2, window_bounds = array<i64: 32, 16>}, {pipeline_mode = #tpu.pipeline_mode<synchronous>, transform_indices = @transform_3, window_bounds = array<i64: 1, 16>}, {pipeline_mode = #tpu.pipeline_mode<synchronous>, transform_indices = @transform_4, window_bounds = array<i64: 1, 16>}, {transform_indices = @transform_5, window_bounds = array<i64: 2, 8>}]} {
    %c0 = arith.constant 0 : index
    %c0_0 = arith.constant 0 : index
    %c0_1 = arith.constant 0 : index
    %0 = vector.load %arg1[%c0, %c0_0, %c0_1] : memref<2x8x32xf32, #tpu.memory_space<vmem>>, vector<2x8x32xf32>
    %1 = arith.truncf %0 : vector<2x8x32xf32> to vector<2x8x32xbf16>
    %2 = vector.shape_cast %1 : vector<2x8x32xbf16> to vector<16x32xbf16>
    %c0_2 = arith.constant 0 : index
    %c0_3 = arith.constant 0 : index
    %3 = vector.load %arg3[%c0_2, %c0_3] : memref<32x16xbf16, #tpu.memory_space<vmem>>, vector<32x16xbf16>
    %cst = arith.constant dense<0.000000e+00> : vector<16x16xf32>
    %4 = tpu.matmul %2, %3, %cst {dimension_numbers = #tpu.dot_dimension_numbers<[1], [0], [0], [1], [0, 0, 1, 1], [], []>} : vector<16x32xbf16>, vector<32x16xbf16>, vector<16x16xf32> -> vector<16x16xf32>
    %c0_4 = arith.constant 0 : index
    %c0_5 = arith.constant 0 : index
    %5 = vector.load %arg4[%c0_4, %c0_5] : memref<1x16xf32, #tpu.memory_space<vmem>>, vector<1x16xf32>
    %6 = vector.broadcast %5 : vector<1x16xf32> to vector<16x16xf32>
    %7 = arith.addf %4, %6 : vector<16x16xf32>
    %8 = math.tanh %7 : vector<16x16xf32>
    %9 = arith.truncf %8 : vector<16x16xf32> to vector<16x16xbf16>
    %c0_6 = arith.constant 0 : index
    %c0_7 = arith.constant 0 : index
    %10 = vector.load %arg5[%c0_6, %c0_7] : memref<1x16xf32, #tpu.memory_space<vmem>>, vector<1x16xf32>
    %11 = arith.extf %9 : vector<16x16xbf16> to vector<16x16xf32>
    %12 = vector.broadcast %10 : vector<1x16xf32> to vector<16x16xf32>
    %13 = arith.mulf %11, %12 : vector<16x16xf32>
    %cst_8 = arith.constant dense<0.000000e+00> : vector<16xf32>
    %14 = vector.multi_reduction <add>, %13, %cst_8 [1] : vector<16x16xf32> to vector<16xf32>
    %15 = vector.shape_cast %14 : vector<16xf32> to vector<16x1xf32>
    %16 = vector.shape_cast %15 : vector<16x1xf32> to vector<2x8xf32>
    %c0_9 = arith.constant 0 : index
    %c0_10 = arith.constant 0 : index
    %17 = vector.load %arg2[%c0_9, %c0_10] : memref<2x8xi32, #tpu.memory_space<vmem>>, vector<2x8xi32>
    %c0_i32 = arith.constant 0 : i32
    %18 = vector.broadcast %c0_i32 : i32 to vector<2x8xi32>
    %19 = arith.cmpi ne, %17, %18 : vector<2x8xi32>
    %cst_11 = arith.constant -1.000000e+30 : f32
    %20 = vector.broadcast %cst_11 : f32 to vector<2x8xf32>
    %21 = arith.select %19, %20, %16 : vector<2x8xi1>, vector<2x8xf32>
    %cst_12 = arith.constant dense<0xFF800000> : vector<2xf32>
    %22 = vector.multi_reduction <maximumf>, %21, %cst_12 [1] : vector<2x8xf32> to vector<2xf32>
    %23 = vector.shape_cast %22 : vector<2xf32> to vector<2x1xf32>
    %24 = vector.broadcast %23 : vector<2x1xf32> to vector<2x8xf32>
    %25 = arith.subf %21, %24 : vector<2x8xf32>
    %26 = math.exp %25 : vector<2x8xf32>
    %cst_13 = arith.constant dense<0.000000e+00> : vector<2xf32>
    %27 = vector.multi_reduction <add>, %26, %cst_13 [1] : vector<2x8xf32> to vector<2xf32>
    %28 = vector.shape_cast %27 : vector<2xf32> to vector<2x1xf32>
    %29 = tpu.reciprocal %28 {approx = true} : vector<2x1xf32> -> vector<2x1xf32>
    %30 = vector.broadcast %29 : vector<2x1xf32> to vector<2x8xf32>
    %31 = arith.mulf %26, %30 : vector<2x8xf32>
    %c0_14 = arith.constant 0 : index
    %c0_15 = arith.constant 0 : index
    %32 = vector.load %arg6[%c0_14, %c0_15] : memref<2x8xf32, #tpu.memory_space<vmem>>, vector<2x8xf32>
    tpu.vector_store %arg6[%c0_14, %c0_15], %31 {strides = array<i32>} : memref<2x8xf32, #tpu.memory_space<vmem>>, vector<2x8xf32>,
    return
  }
  func.func @transform_0(%arg0: i32) -> (i32, i32, i32) {
    %c0_i32 = arith.constant 0 : i32
    %c0_i32_0 = arith.constant 0 : i32
    %c0_i32_1 = arith.constant 0 : i32
    return %arg0, %c0_i32, %c0_i32_0 : i32, i32, i32
  }
  func.func @transform_1(%arg0: i32) -> (i32, i32) {
    %c0_i32 = arith.constant 0 : i32
    %c0_i32_0 = arith.constant 0 : i32
    return %arg0, %c0_i32 : i32, i32
  }
  func.func @transform_2(%arg0: i32) -> (i32, i32) {
    %c0_i32 = arith.constant 0 : i32
    %c0_i32_0 = arith.constant 0 : i32
    %c0_i32_1 = arith.constant 0 : i32
    return %c0_i32, %c0_i32_0 : i32, i32
  }
  func.func @transform_3(%arg0: i32) -> (i32, i32) {
    %c0_i32 = arith.constant 0 : i32
    %c0_i32_0 = arith.constant 0 : i32
    %c0_i32_1 = arith.constant 0 : i32
    return %c0_i32, %c0_i32_0 : i32, i32
  }
  func.func @transform_4(%arg0: i32) -> (i32, i32) {
    %c0_i32 = arith.constant 0 : i32
    %c0_i32_0 = arith.constant 0 : i32
    %c0_i32_1 = arith.constant 0 : i32
    return %c0_i32, %c0_i32_0 : i32, i32
  }
  func.func @transform_5(%arg0: i32) -> (i32, i32) {
    %c0_i32 = arith.constant 0 : i32
    %c0_i32_0 = arith.constant 0 : i32
    return %arg0, %c0_i32 : i32, i32
  }
}

</mosaic_0001>

<llo_original>
// kernel: tpu_custom_call.1
$region0: #{tpu_custom_call.1}
  #allocation0 [shape = 'u32[]', space=smem, size = 0x4, offset = 0x4, fixed_abs, tag = 'smem constant byte address 0x4 - core index']
  #allocation1 [shape = 'u32[144,128]{1,0:T(1,128)}', space=vmem, size = 0x12000, scoped, tag = 'internal scratch']
  %s0 = inlined_call_operand.vmem [shape: f32[2,8,32], index: 0, kind: input, shape index: {}]
  %s1 = inlined_call_operand.vmem [shape: s32[2,8], index: 1, kind: input, shape index: {}]
  %s2 = inlined_call_operand.vmem [shape: bf16[32,16], index: 2, kind: input, shape index: {}]
  %s3 = inlined_call_operand.vmem [shape: f32[1,16], index: 3, kind: input, shape index: {}]
  %s4 = inlined_call_operand.vmem [shape: f32[1,16], index: 4, kind: input, shape index: {}]
  %s5 = inlined_call_operand.hbm [shape: f32[2,8], index: 5, kind: output, shape index: {}]
  %s6 = sld [smem:[#allocation0]]
  $region30: #{tpu_custom_call.1} parent=0
    _
  %s8 = ssub.s32 1, %s6
  %s9 = scalar_select 0, %s8, %s6
  $region1: #{tpu_custom_call.1} parent=0
    #allocation2 [shape = 'u8[1024]{0}', space=vmem, size = 0x400, scoped, tag = 'output window, operand 0, single buffered']
    #allocation3 [shape = 's32[1]{0}', space=sflag, size = 0x4, scoped, tag = 'scoped memory for tpu_custom_call.1']
    %10 = vsyncpa [#allocation3], 0
    // Predicated region
    $region2: #{tpu_custom_call.1} parent=1 // pred_check
      _
    $region3: #{tpu_custom_call.1} parent=1 // pred_check_branch
      %12 = sbr.rel (0) target = $region5
    $region4: #{tpu_custom_call.1} parent=1 // pred_region
      _
    $region5: #{tpu_custom_call.1} parent=1 // pred_fallthru
      _
    // Predicated region
    $region6: #{tpu_custom_call.1} parent=1 // pred_check
      _
    $region7: #{tpu_custom_call.1} parent=1 // pred_check_branch
      %14 = sbr.rel (0) target = $region9
    $region8: #{tpu_custom_call.1} parent=1 // pred_region
      _
    $region9: #{tpu_custom_call.1} parent=1 // pred_fallthru
      _
    // Predicated region
    $region10: #{tpu_custom_call.1} parent=1 // pred_check
      _
    $region11: #{tpu_custom_call.1} parent=1 // pred_check_branch
      %16 = sbr.rel (0) target = $region13
    $region12: #{tpu_custom_call.1} parent=1 // pred_region
      _
    $region13: #{tpu_custom_call.1} parent=1 // pred_fallthru
      _
    // Predicated region
    $region14: #{tpu_custom_call.1} parent=1 // pred_check
      _
    $region15: #{tpu_custom_call.1} parent=1 // pred_check_branch
      %18 = sbr.rel (0) target = $region17
    $region16: #{tpu_custom_call.1} parent=1 // pred_region
      _
    $region17: #{tpu_custom_call.1} parent=1 // pred_fallthru
      _
    // Predicated region
    $region18: #{tpu_custom_call.1} parent=1 // pred_check
      _
    $region19: #{tpu_custom_call.1} parent=1 // pred_check_branch
      %20 = sbr.rel (0) target = $region21
    $region20: #{tpu_custom_call.1} parent=1 // pred_region
      _
    $region21: #{tpu_custom_call.1} parent=1 // pred_fallthru
      _
    %v22 = vld [vmem:[%s0] sm:$0xff]
    %v23 = vld [vmem:[%s0 + $0x8] sm:$0xff]
    %v24 = vpack.c.bf16 %v22, %v22
    %v25 = vpack.c.bf16 %v23, %v23
    %v26 = vld [vmem:[%s2] sm:$0xf]
    %v27 = vld [vmem:[%s2 + $0x4] sm:$0xf]
    %v28 = vld [vmem:[%s2 + $0x8] sm:$0xf]
    %v29 = vld [vmem:[%s2 + $0xc] sm:$0xf]
    %v30 = vld [vmem:[%s3] sm:$0x1]
    %v32 = vlaneseq
    %v33 = vshrl.u32 %v32, 7
    %v34 = vsub.s32 0, %v33
    %v35 = vrot.slane %v30, %v34
    %v39 = vunpack.c.l.b16 %v24
    %v40 = vunpack.c.l.b16 %v25
    %v41 = vpack.c.b16 %v40, %v39
    %v46 = vunpack.c.l.b16 %v26
    %v47 = vunpack.c.l.b16 %v27
    %v48 = vunpack.c.l.b16 %v28
    %v49 = vunpack.c.l.b16 %v29
    %v50 = vpack.c.b16 %v47, %v46
    %v51 = vpack.c.b16 %v49, %v48
    %vm54 = vcmask 261120
    %v56 = vsel %vm54, %v41, 0
    %58 = vmatprep.subr.bf16.mxu0 0
    %59 = vmatpush1.bf16.msra.mxu0 %v50
    %60 = vmatprep.subr.bf16.mxu0 0
    %61 = vmatpush1.bf16.msra.mxu0 %v51
    %62 = vmatprep.subr.bf16.mxu0 0
    %63 = vmatpush1.bf16.msra.mxu0 0
    %64 = vmatprep.subr.bf16.mxu0 0
    %65 = vmatpush1.bf16.msra.mxu0 0
    %66 = vmatprep.subr.bf16.mxu0 0
    %67 = vmatpush1.bf16.msra.mxu0 0
    %68 = vmatprep.subr.bf16.mxu0 0
    %69 = vmatpush1.bf16.msra.mxu0 0
    %70 = vmatprep.subr.bf16.mxu0 0
    %71 = vmatpush1.bf16.msra.mxu0 0
    %72 = vmatprep.subr.bf16.mxu0 0
    %73 = vmatpush1.bf16.msra.mxu0 0
    %74 = vmatprep.subr.bf16.mxu0 0
    %75 = vmatpush1.bf16.msra.mxu0 0
    %76 = vmatprep.subr.bf16.mxu0 0
    %77 = vmatpush1.bf16.msra.mxu0 0
    %78 = vmatprep.subr.bf16.mxu0 0
    %79 = vmatpush1.bf16.msra.mxu0 0
    %80 = vmatprep.subr.bf16.mxu0 0
    %81 = vmatpush1.bf16.msra.mxu0 0
    %82 = vmatprep.subr.bf16.mxu0 0
    %83 = vmatpush1.bf16.msra.mxu0 0
    %84 = vmatprep.subr.bf16.mxu0 0
    %85 = vmatpush1.bf16.msra.mxu0 0
    %86 = vmatprep.subr.bf16.mxu0 0
    %87 = vmatpush1.bf16.msra.mxu0 0
    %88 = vmatprep.subr.bf16.mxu0 0
    %89 = vmatpush1.bf16.msra.mxu0 0
    %90 = vmatprep.mubr.bf16.mxu0 0
    %91 = vmatmul.mubr.bf16.gmra.mrb[0].mxu0 %v56
    %v92 = vpop.f32.mrb[0].mxu0
    %v93 = vadd.f32 %v35, %v92
    %v94 = vpop.f32.mrb[0].mxu0
    %v95 = vpop.f32.mrb[0].mxu0
    %v96 = vadd.f32 %v35, %v95
    %v97 = vpop.f32.mrb[0].mxu0
    %98 = vdwg.mxu0
    %v99 = vtanh.pop %v93
    %v100 = vtanh.pop %v96
    %v101 = vpack.c.bf16 %v100, %v99
    %v102 = vld [vmem:[%s4] sm:$0x1]
    %v103 = vunpack.c.l.bf16 %v101
    %v104 = vunpack.c.h.bf16 %v101
    %v106 = vlaneseq
    %v107 = vshrl.u32 %v106, 7
    %v108 = vsub.s32 0, %v107
    %v109 = vrot.slane %v102, %v108
    %v111 = vmul.f32 %v103, %v109
    %v112 = vmul.f32 %v104, %v109
    %vm113 = vcmask 130048
    %v114 = vsel %vm113, %v111, 0.0
    %115 = vadd.xlane.f32.xlu0 %v114
    %v116 = vpop.xlane.xlu0 %115
    %v117 = vsel %vm113, %v112, 0.0
    %118 = vadd.xlane.f32.xlu0 %v117
    %v119 = vpop.xlane.xlu0 %118
    %v120 = vld [vmem:[%s1] sm:$0x3]
    %vm121 = vcmp.ne.s32.totalorder %v120, 0
    %v124 = vlaneseq
    %v125 = vand.u32 %v124, 127
    %v126 = vlaneseq
    %v127 = vshrl.u32 %v126, 7
    %v128 = vsub.s32 %v125, %v127
    %v129 = vrot.slane %v116, %v128
    %v130 = vlaneseq
    %v131 = vshrl.u32 %v130, 7
    %v132 = vsub.s32 %v125, %v131
    %v133 = vrot.slane %v119, %v132
    %vm134 = vcmask 1041409
    %v135 = vsel %vm134, %v133, %v129
    %v137 = vsel %vm121, -1e+30, %v135
    %vm138 = vcmask 58368
    %v139 = vsel %vm138, %v137, -inf
    %140 = vmax.xlane.f32.xlu0 %v139
    %v141 = vpop.xlane.xlu0 %140
    %v142 = vsub.f32 %v137, %v141
    %v143 = vmul.f32 %v142, 1.442695
    %v144 = vpow.pop %v143
    %v145 = vsel %vm138, %v144, 0.0
    %146 = vadd.xlane.f32.xlu0 %v145
    %v147 = vpop.xlane.xlu0 %146
    %v148 = vrcp.pop %v147
    %v149 = vmul.f32 %v144, %v148
    %150 = vst.msk [vmem:[#allocation2] sm:$0x3] %vm138, %v149
    // Predicated region
    $region22: #{tpu_custom_call.1} parent=1 // pred_check
      _
    $region23: #{tpu_custom_call.1} parent=1 // pred_check_branch
      %152 = sbr.rel (0) target = $region25
    $region24: #{tpu_custom_call.1} parent=1 // pred_region
      %s154 = ssub.s32 32, 32
      %155 = vsyncadd [#allocation3], %s154
      %s157 = sshll.u32 [#allocation2], 4
      %s158 = int_to_ptr.vmem [resolvable:$true] %s157
      %160 = dma.vmem_to_hbm [thread:$0]  %s158, 32, %s5, [#allocation3]
    $region25: #{tpu_custom_call.1} parent=1 // pred_fallthru
      _
    // Predicated region
    $region26: #{tpu_custom_call.1} parent=1 // pred_check
      _
    $region27: #{tpu_custom_call.1} parent=1 // pred_check_branch
      %162 = sbr.rel (0) target = $region29
    $region28: #{tpu_custom_call.1} parent=1 // pred_region
      %163 = dma.done [#allocation3], 32
    $region29: #{tpu_custom_call.1} parent=1 // pred_fallthru
      _
    %164 = vsyncpa [#allocation3], 1

</llo_original>
